<compile_context>
chip_gen: v5e
topology: v5e:2x2
jax: 0.10.0
libtpu: 0.0.40
codegen_flags: <defaults>
</compile_context>

<pallas_src>
import functools

import jax
import jax.numpy as jnp
from jax.experimental import pallas as pl
from jax.experimental.pallas import tpu as pltpu


def _round_up(x, m):
    return ((x + m - 1) // m) * m


def _elu(x):
    # F.elu(alpha=1): x > 0 ? x : exp(x) - 1.
    # Clamp the exp argument to <= 0 so the unselected branch never produces
    # inf and the EUP never chews on huge positive arguments.
    return jnp.where(x > 0.0, x, jnp.exp(jnp.minimum(x, 0.0)) - 1.0)


def action_model_kernel(x_ref,
                        w1_ref, b1_ref,
                        w2_ref, b2_ref,
                        w3_ref, b3_ref,
                        w4_ref, b4_ref,
                        out_ref,
                        *, action_dim, max_logvar, min_logvar):
    x = x_ref[...].astype(jnp.float32)

    h = _elu(jnp.dot(x, w1_ref[...], preferred_element_type=jnp.float32) + b1_ref[...])
    h = _elu(jnp.dot(h, w2_ref[...], preferred_element_type=jnp.float32) + b2_ref[...])
    h = _elu(jnp.dot(h, w3_ref[...], preferred_element_type=jnp.float32) + b3_ref[...])
    a = jnp.dot(h, w4_ref[...], preferred_element_type=jnp.float32) + b4_ref[...]

    # Fused head computed over the full (tm, 2*action_dim) slab, then a single
    # lane-masked select + one dense store (no sub-vreg lane slices, no second
    # output DMA stream).
    mean_all = jnp.tanh(a) * 2.0
    # sigmoid(x) = 1 / (1 + exp(-x)); the divide goes to the EUP approx path.
    sig = pl.reciprocal(1.0 + jnp.exp(-a), approx=True)
    var_all = jnp.exp(min_logvar + (max_logvar - min_logvar) * sig)

    lane = jax.lax.broadcasted_iota(jnp.int32, a.shape, 1)
    out_ref[...] = jnp.where(lane < action_dim, mean_all, var_all)


def _reference_forward(states, params, action_dim, *, max_logvar=-1.0, min_logvar=-5.0):
    """Pure-JAX reference replicating the PyTorch forward exactly."""
    w1, b1, w2, b2, w3, b3, w4, b4 = params
    h = jax.nn.elu(states @ w1 + b1)
    h = jax.nn.elu(h @ w2 + b2)
    h = jax.nn.elu(h @ w3 + b3)
    a = h @ w4 + b4
    mean, logvar = a[..., :action_dim], a[..., action_dim:]
    mean = jnp.tanh(mean) * 2.0
    logvar = min_logvar + (max_logvar - min_logvar) * jax.nn.sigmoid(logvar)
    return mean, jnp.exp(logvar)


def action_model_forward(states, params, action_dim, *, tm=None,
                         max_logvar=-1.0, min_logvar=-5.0, use_pallas=None):
    """states: (B, T, in_size) float32 -> (mean, var), each (B, T, action_dim)."""
    w1, b1, w2, b2, w3, b3, w4, b4 = params
    B, T, in_size = states.shape
    hidden = w1.shape[1]
    out2 = w4.shape[1]          # action_dim * 2
    N = B * T

    # For a handful of rows the pallas_call launch + pipeline prologue dominate;
    # fall back to the XLA-fused dense path unless explicitly forced.
    if use_pallas is None:
        use_pallas = N >= 256
    if not use_pallas:
        return _reference_forward(states, params, action_dim,
                                  max_logvar=max_logvar, min_logvar=min_logvar)

    # ---- row-tile choice ---------------------------------------------------
    # Big tiles amortize per-step pipeline overhead (a (512, 24) f32 x tile is
    # only 48 KB, far below VMEM on v5e/v6e/v7x).  When the whole problem fits
    # in a single tile, keep >= 2 grid steps so both v7x TensorCores get work.
    if tm is None:
        tm = 512
        if N <= tm:
            tm = max(8, _round_up(-(-N // 2), 8))
    Np = _round_up(N, tm)

    x = states.reshape(N, in_size).astype(jnp.float32)
    if Np != N:
        x = jnp.pad(x, ((0, Np - N), (0, 0)))

    kernel = functools.partial(
        action_model_kernel,
        action_dim=action_dim,
        max_logvar=float(max_logvar),
        min_logvar=float(min_logvar),
    )

    flops = 2 * Np * (in_size * hidden + 2 * hidden * hidden + hidden * out2)
    transcendentals = Np * (3 * hidden + 3 * out2)   # 3x ELU exp + tanh/sigmoid/exp head
    weight_bytes = sum(int(p.size) * 4 for p in params)
    bytes_accessed = Np * (in_size + out2) * 4 + weight_bytes

    out = pl.pallas_call(
        kernel,
        out_shape=jax.ShapeDtypeStruct((Np, out2), jnp.float32),
        grid_spec=pltpu.PrefetchScalarGridSpec(
            num_scalar_prefetch=0,
            grid=(Np // tm,),
            in_specs=[
                pl.BlockSpec((tm, in_size), lambda i: (i, 0)),      # x row tile
                # Weights/biases: constant index maps -> DMA'd once, revisited
                # from VMEM on every subsequent grid step (~13 KB total).
                pl.BlockSpec((in_size, hidden), lambda i: (0, 0)),  # w1
                pl.BlockSpec((1, hidden), lambda i: (0, 0)),        # b1
                pl.BlockSpec((hidden, hidden), lambda i: (0, 0)),   # w2
                pl.BlockSpec((1, hidden), lambda i: (0, 0)),        # b2
                pl.BlockSpec((hidden, hidden), lambda i: (0, 0)),   # w3
                pl.BlockSpec((1, hidden), lambda i: (0, 0)),        # b3
                pl.BlockSpec((hidden, out2), lambda i: (0, 0)),     # w4
                pl.BlockSpec((1, out2), lambda i: (0, 0)),          # b4
            ],
            # Single merged (tm, 2*action_dim) output slab -> one store stream.
            out_specs=pl.BlockSpec((tm, out2), lambda i: (i, 0)),
        ),
        compiler_params=pltpu.CompilerParams(
            dimension_semantics=("parallel",)),
        cost_estimate=pl.CostEstimate(
            flops=flops,
            transcendentals=transcendentals,
            bytes_accessed=bytes_accessed),
    )(x, w1, b1, w2, b2, w3, b3, w4, b4)

    out = out[:N]
    mean = out[:, :action_dim].reshape(B, T, action_dim)
    var = out[:, action_dim:].reshape(B, T, action_dim)
    return mean, var


def init_params(key, in_size, hidden_size, action_dim):
    """Deterministic nn.Linear-style init: U(-1/sqrt(fan_in), 1/sqrt(fan_in))."""
    def linear(k, fan_in, fan_out):
        kw, kb = jax.random.split(k)
        bound = 1.0 / jnp.sqrt(jnp.float32(fan_in))
        w = jax.random.uniform(kw, (fan_in, fan_out), jnp.float32, -bound, bound)
        b = jax.random.uniform(kb, (1, fan_out), jnp.float32, -bound, bound)
        return w, b

    k1, k2, k3, k4 = jax.random.split(key, 4)
    w1, b1 = linear(k1, in_size, hidden_size)
    w2, b2 = linear(k2, hidden_size, hidden_size)
    w3, b3 = linear(k3, hidden_size, hidden_size)
    w4, b4 = linear(k4, hidden_size, action_dim * 2)
    return (w1, b1, w2, b2, w3, b3, w4, b4)


if __name__ == "__main__":
    in_size, hidden_size, action_dim = 24, 32, 4

    key = jax.random.PRNGKey(0)
    kp, kx1, kx2 = jax.random.split(key, 3)
    params = init_params(kp, in_size, hidden_size, action_dim)

    # ---- test 1: small (B, T) = (2, 8); force the Pallas path ---------------
    B, T = 2, 8
    states = jax.random.normal(kx1, (B, T, in_size), jnp.float32)
    mean, var = action_model_forward(states, params, action_dim, use_pallas=True)
    jax.block_until_ready((mean, var))

    ref_mean, ref_var = _reference_forward(states, params, action_dim)
    assert mean.shape == (B, T, action_dim) and var.shape == (B, T, action_dim)
    assert jnp.allclose(mean, ref_mean, atol=1e-5, rtol=1e-5)
    # var goes through the EUP approx-reciprocal sigmoid -> slightly looser tol.
    assert jnp.allclose(var, ref_var, atol=1e-4, rtol=2e-2)

    # ---- test 2: larger N exercises 512-row tiles + ragged tail padding -----
    B2, T2 = 4, 300
    states2 = jax.random.normal(kx2, (B2, T2, in_size), jnp.float32)
    mean2, var2 = action_model_forward(states2, params, action_dim)
    jax.block_until_ready((mean2, var2))
    ref_mean2, ref_var2 = _reference_forward(states2, params, action_dim)
    assert jnp.allclose(mean2, ref_mean2, atol=1e-5, rtol=1e-5)
    assert jnp.allclose(var2, ref_var2, atol=1e-4, rtol=2e-2)

    print("KERNEL_OK")
</pallas_src>

<mosaic_0001>
module attributes {stable_mosaic.version = 11 : i64} {
  func.func @action_model_kernel(%arg0: i32, %arg1: memref<8x24xf32, #tpu.memory_space<vmem>>, %arg2: memref<24x32xf32, #tpu.memory_space<vmem>>, %arg3: memref<1x32xf32, #tpu.memory_space<vmem>>, %arg4: memref<32x32xf32, #tpu.memory_space<vmem>>, %arg5: memref<1x32xf32, #tpu.memory_space<vmem>>, %arg6: memref<32x32xf32, #tpu.memory_space<vmem>>, %arg7: memref<1x32xf32, #tpu.memory_space<vmem>>, %arg8: memref<32x8xf32, #tpu.memory_space<vmem>>, %arg9: memref<1x8xf32, #tpu.memory_space<vmem>>, %arg10: memref<8x8xf32, #tpu.memory_space<vmem>>) attributes {dimension_semantics = [#tpu.dimension_semantics<parallel>], iteration_bounds = array<i64: 2>, scalar_prefetch = 0 : i64, scratch_operands = 0 : i64, tpu.core_type = #tpu.core_type<tc>, window_params = [{transform_indices = @transform_0, window_bounds = array<i64: 8, 24>}, {pipeline_mode = #tpu.pipeline_mode<synchronous>, transform_indices = @transform_1, window_bounds = array<i64: 24, 32>}, {pipeline_mode = #tpu.pipeline_mode<synchronous>, transform_indices = @transform_2, window_bounds = array<i64: 1, 32>}, {pipeline_mode = #tpu.pipeline_mode<synchronous>, transform_indices = @transform_3, window_bounds = array<i64: 32, 32>}, {pipeline_mode = #tpu.pipeline_mode<synchronous>, transform_indices = @transform_4, window_bounds = array<i64: 1, 32>}, {pipeline_mode = #tpu.pipeline_mode<synchronous>, transform_indices = @transform_5, window_bounds = array<i64: 32, 32>}, {pipeline_mode = #tpu.pipeline_mode<synchronous>, transform_indices = @transform_6, window_bounds = array<i64: 1, 32>}, {pipeline_mode = #tpu.pipeline_mode<synchronous>, transform_indices = @transform_7, window_bounds = array<i64: 32, 8>}, {pipeline_mode = #tpu.pipeline_mode<synchronous>, transform_indices = @transform_8, window_bounds = array<i64: 1, 8>}, {transform_indices = @transform_9, window_bounds = array<i64: 8, 8>}]} {
    %c0 = arith.constant 0 : index
    %c0_0 = arith.constant 0 : index
    %0 = vector.load %arg1[%c0, %c0_0] : memref<8x24xf32, #tpu.memory_space<vmem>>, vector<8x24xf32>
    %c0_1 = arith.constant 0 : index
    %c0_2 = arith.constant 0 : index
    %1 = vector.load %arg2[%c0_1, %c0_2] : memref<24x32xf32, #tpu.memory_space<vmem>>, vector<24x32xf32>
    %cst = arith.constant dense<0.000000e+00> : vector<8x32xf32>
    %2 = tpu.matmul %0, %1, %cst {dimension_numbers = #tpu.dot_dimension_numbers<[1], [0], [0], [1], [0, 0, 1, 1], [], []>} : vector<8x24xf32>, vector<24x32xf32>, vector<8x32xf32> -> vector<8x32xf32>
    %c0_3 = arith.constant 0 : index
    %c0_4 = arith.constant 0 : index
    %3 = vector.load %arg3[%c0_3, %c0_4] : memref<1x32xf32, #tpu.memory_space<vmem>>, vector<1x32xf32>
    %4 = vector.broadcast %3 : vector<1x32xf32> to vector<8x32xf32>
    %5 = arith.addf %2, %4 : vector<8x32xf32>
    %cst_5 = arith.constant 0.000000e+00 : f32
    %6 = vector.broadcast %cst_5 : f32 to vector<8x32xf32>
    %7 = arith.cmpf ogt, %5, %6 : vector<8x32xf32>
    %cst_6 = arith.constant 0.000000e+00 : f32
    %8 = vector.broadcast %cst_6 : f32 to vector<8x32xf32>
    %9 = arith.minimumf %5, %8 : vector<8x32xf32>
    %10 = math.exp %9 : vector<8x32xf32>
    %cst_7 = arith.constant 1.000000e+00 : f32
    %11 = vector.broadcast %cst_7 : f32 to vector<8x32xf32>
    %12 = arith.subf %10, %11 : vector<8x32xf32>
    %13 = arith.select %7, %5, %12 : vector<8x32xi1>, vector<8x32xf32>
    %c0_8 = arith.constant 0 : index
    %c0_9 = arith.constant 0 : index
    %14 = vector.load %arg4[%c0_8, %c0_9] : memref<32x32xf32, #tpu.memory_space<vmem>>, vector<32x32xf32>
    %cst_10 = arith.constant dense<0.000000e+00> : vector<8x32xf32>
    %15 = tpu.matmul %13, %14, %cst_10 {dimension_numbers = #tpu.dot_dimension_numbers<[1], [0], [0], [1], [0, 0, 1, 1], [], []>} : vector<8x32xf32>, vector<32x32xf32>, vector<8x32xf32> -> vector<8x32xf32>
    %c0_11 = arith.constant 0 : index
    %c0_12 = arith.constant 0 : index
    %16 = vector.load %arg5[%c0_11, %c0_12] : memref<1x32xf32, #tpu.memory_space<vmem>>, vector<1x32xf32>
    %17 = vector.broadcast %16 : vector<1x32xf32> to vector<8x32xf32>
    %18 = arith.addf %15, %17 : vector<8x32xf32>
    %cst_13 = arith.constant 0.000000e+00 : f32
    %19 = vector.broadcast %cst_13 : f32 to vector<8x32xf32>
    %20 = arith.cmpf ogt, %18, %19 : vector<8x32xf32>
    %cst_14 = arith.constant 0.000000e+00 : f32
    %21 = vector.broadcast %cst_14 : f32 to vector<8x32xf32>
    %22 = arith.minimumf %18, %21 : vector<8x32xf32>
    %23 = math.exp %22 : vector<8x32xf32>
    %cst_15 = arith.constant 1.000000e+00 : f32
    %24 = vector.broadcast %cst_15 : f32 to vector<8x32xf32>
    %25 = arith.subf %23, %24 : vector<8x32xf32>
    %26 = arith.select %20, %18, %25 : vector<8x32xi1>, vector<8x32xf32>
    %c0_16 = arith.constant 0 : index
    %c0_17 = arith.constant 0 : index
    %27 = vector.load %arg6[%c0_16, %c0_17] : memref<32x32xf32, #tpu.memory_space<vmem>>, vector<32x32xf32>
    %cst_18 = arith.constant dense<0.000000e+00> : vector<8x32xf32>
    %28 = tpu.matmul %26, %27, %cst_18 {dimension_numbers = #tpu.dot_dimension_numbers<[1], [0], [0], [1], [0, 0, 1, 1], [], []>} : vector<8x32xf32>, vector<32x32xf32>, vector<8x32xf32> -> vector<8x32xf32>
    %c0_19 = arith.constant 0 : index
    %c0_20 = arith.constant 0 : index
    %29 = vector.load %arg7[%c0_19, %c0_20] : memref<1x32xf32, #tpu.memory_space<vmem>>, vector<1x32xf32>
    %30 = vector.broadcast %29 : vector<1x32xf32> to vector<8x32xf32>
    %31 = arith.addf %28, %30 : vector<8x32xf32>
    %cst_21 = arith.constant 0.000000e+00 : f32
    %32 = vector.broadcast %cst_21 : f32 to vector<8x32xf32>
    %33 = arith.cmpf ogt, %31, %32 : vector<8x32xf32>
    %cst_22 = arith.constant 0.000000e+00 : f32
    %34 = vector.broadcast %cst_22 : f32 to vector<8x32xf32>
    %35 = arith.minimumf %31, %34 : vector<8x32xf32>
    %36 = math.exp %35 : vector<8x32xf32>
    %cst_23 = arith.constant 1.000000e+00 : f32
    %37 = vector.broadcast %cst_23 : f32 to vector<8x32xf32>
    %38 = arith.subf %36, %37 : vector<8x32xf32>
    %39 = arith.select %33, %31, %38 : vector<8x32xi1>, vector<8x32xf32>
    %c0_24 = arith.constant 0 : index
    %c0_25 = arith.constant 0 : index
    %40 = vector.load %arg8[%c0_24, %c0_25] : memref<32x8xf32, #tpu.memory_space<vmem>>, vector<32x8xf32>
    %cst_26 = arith.constant dense<0.000000e+00> : vector<8x8xf32>
    %41 = tpu.matmul %39, %40, %cst_26 {dimension_numbers = #tpu.dot_dimension_numbers<[1], [0], [0], [1], [0, 0, 1, 1], [], []>} : vector<8x32xf32>, vector<32x8xf32>, vector<8x8xf32> -> vector<8x8xf32>
    %c0_27 = arith.constant 0 : index
    %c0_28 = arith.constant 0 : index
    %42 = vector.load %arg9[%c0_27, %c0_28] : memref<1x8xf32, #tpu.memory_space<vmem>>, vector<1x8xf32>
    %43 = vector.broadcast %42 : vector<1x8xf32> to vector<8x8xf32>
    %44 = arith.addf %41, %43 : vector<8x8xf32>
    %45 = math.tanh %44 : vector<8x8xf32>
    %cst_29 = arith.constant 2.000000e+00 : f32
    %46 = vector.broadcast %cst_29 : f32 to vector<8x8xf32>
    %47 = arith.mulf %45, %46 : vector<8x8xf32>
    %cst_30 = arith.constant 0.000000e+00 : f32
    %48 = vector.broadcast %cst_30 : f32 to vector<8x8xf32>
    %49 = arith.subf %48, %44 : vector<8x8xf32>
    %50 = math.exp %49 : vector<8x8xf32>
    %cst_31 = arith.constant 1.000000e+00 : f32
    %51 = vector.broadcast %cst_31 : f32 to vector<8x8xf32>
    %52 = arith.addf %51, %50 : vector<8x8xf32>
    %53 = tpu.reciprocal %52 {approx = true} : vector<8x8xf32> -> vector<8x8xf32>
    %cst_32 = arith.constant 4.000000e+00 : f32
    %54 = vector.broadcast %cst_32 : f32 to vector<8x8xf32>
    %55 = arith.mulf %54, %53 : vector<8x8xf32>
    %cst_33 = arith.constant -5.000000e+00 : f32
    %56 = vector.broadcast %cst_33 : f32 to vector<8x8xf32>
    %57 = arith.addf %56, %55 : vector<8x8xf32>
    %58 = math.exp %57 : vector<8x8xf32>
    %59 = tpu.iota {dimensions = array<i32: 1>} : vector<8x8xi32>
    %c4_i32 = arith.constant 4 : i32
    %60 = vector.broadcast %c4_i32 : i32 to vector<8x8xi32>
    %61 = arith.cmpi slt, %59, %60 : vector<8x8xi32>
    %62 = arith.select %61, %47, %58 : vector<8x8xi1>, vector<8x8xf32>
    %c0_34 = arith.constant 0 : index
    %c0_35 = arith.constant 0 : index
    %63 = vector.load %arg10[%c0_34, %c0_35] : memref<8x8xf32, #tpu.memory_space<vmem>>, vector<8x8xf32>
    tpu.vector_store %arg10[%c0_34, %c0_35], %62 {strides = array<i32>} : memref<8x8xf32, #tpu.memory_space<vmem>>, vector<8x8xf32>,
    return
  }
  func.func @transform_0(%arg0: i32) -> (i32, i32) {
    %c0_i32 = arith.constant 0 : i32
    %c0_i32_0 = arith.constant 0 : i32
    return %arg0, %c0_i32 : i32, i32
  }
  func.func @transform_1(%arg0: i32) -> (i32, i32) {
    %c0_i32 = arith.constant 0 : i32
    %c0_i32_0 = arith.constant 0 : i32
    %c0_i32_1 = arith.constant 0 : i32
    return %c0_i32, %c0_i32_0 : i32, i32
  }
  func.func @transform_2(%arg0: i32) -> (i32, i32) {
    %c0_i32 = arith.constant 0 : i32
    %c0_i32_0 = arith.constant 0 : i32
    %c0_i32_1 = arith.constant 0 : i32
    return %c0_i32, %c0_i32_0 : i32, i32
  }
  func.func @transform_3(%arg0: i32) -> (i32, i32) {
    %c0_i32 = arith.constant 0 : i32
    %c0_i32_0 = arith.constant 0 : i32
    %c0_i32_1 = arith.constant 0 : i32
    return %c0_i32, %c0_i32_0 : i32, i32
  }
  func.func @transform_4(%arg0: i32) -> (i32, i32) {
    %c0_i32 = arith.constant 0 : i32
    %c0_i32_0 = arith.constant 0 : i32
    %c0_i32_1 = arith.constant 0 : i32
    return %c0_i32, %c0_i32_0 : i32, i32
  }
  func.func @transform_5(%arg0: i32) -> (i32, i32) {
    %c0_i32 = arith.constant 0 : i32
    %c0_i32_0 = arith.constant 0 : i32
    %c0_i32_1 = arith.constant 0 : i32
    return %c0_i32, %c0_i32_0 : i32, i32
  }
  func.func @transform_6(%arg0: i32) -> (i32, i32) {
    %c0_i32 = arith.constant 0 : i32
    %c0_i32_0 = arith.constant 0 : i32
    %c0_i32_1 = arith.constant 0 : i32
    return %c0_i32, %c0_i32_0 : i32, i32
  }
  func.func @transform_7(%arg0: i32) -> (i32, i32) {
    %c0_i32 = arith.constant 0 : i32
    %c0_i32_0 = arith.constant 0 : i32
    %c0_i32_1 = arith.constant 0 : i32
    return %c0_i32, %c0_i32_0 : i32, i32
  }
  func.func @transform_8(%arg0: i32) -> (i32, i32) {
    %c0_i32 = arith.constant 0 : i32
    %c0_i32_0 = arith.constant 0 : i32
    %c0_i32_1 = arith.constant 0 : i32
    return %c0_i32, %c0_i32_0 : i32, i32
  }
  func.func @transform_9(%arg0: i32) -> (i32, i32) {
    %c0_i32 = arith.constant 0 : i32
    %c0_i32_0 = arith.constant 0 : i32
    return %arg0, %c0_i32 : i32, i32
  }
}

</mosaic_0001>

<llo_original>
// kernel: tpu_custom_call.1
$region0: #{tpu_custom_call.1}
  #allocation0 [shape = 'u32[]', space=smem, size = 0x4, offset = 0x4, fixed_abs, tag = 'smem constant byte address 0x4 - core index']
  #allocation1 [shape = 'u32[72,128]{1,0:T(1,128)}', space=vmem, size = 0x9000, scoped, tag = 'internal scratch']
  %s0 = inlined_call_operand.hbm [shape: f32[16,24], index: 0, kind: input, shape index: {}]
  %s1 = inlined_call_operand.hbm [shape: f32[24,32], index: 1, kind: input, shape index: {}]
  %s2 = inlined_call_operand.vmem [shape: f32[1,32], index: 2, kind: input, shape index: {}]
  %s3 = inlined_call_operand.vmem [shape: f32[32,32], index: 3, kind: input, shape index: {}]
  %s4 = inlined_call_operand.vmem [shape: f32[1,32], index: 4, kind: input, shape index: {}]
  %s5 = inlined_call_operand.hbm [shape: f32[32,32], index: 5, kind: input, shape index: {}]
  %s6 = inlined_call_operand.vmem [shape: f32[1,32], index: 6, kind: input, shape index: {}]
  %s7 = inlined_call_operand.vmem [shape: f32[32,8], index: 7, kind: input, shape index: {}]
  %s8 = inlined_call_operand.vmem [shape: f32[1,8], index: 8, kind: input, shape index: {}]
  %s9 = inlined_call_operand.vmem [shape: f32[16,8], index: 9, kind: output, shape index: {}]
  %s10 = sld [smem:[#allocation0]]
  $region81: #{tpu_custom_call.1} parent=0
    _
  %s12 = ssub.s32 1, %s10
  %s13 = scalar_select 0, %s12, %s10
  $region1: #{tpu_custom_call.1} parent=0
    #allocation2 [shape = 'u8[8192]{0}', space=vmem, size = 0x2000, scoped, tag = 'input window, operand 0']
    #allocation3 [shape = 's32[2]{0}', space=sflag, size = 0x8, scoped, tag = 'scoped memory for tpu_custom_call.1']
    #allocation4 [shape = 'u8[12288]{0}', space=vmem, size = 0x3000, scoped, tag = 'input window, operand 1, single buffered']
    #allocation5 [shape = 's32[1]{0}', space=sflag, size = 0x4, scoped, tag = 'scoped memory for tpu_custom_call.1']
    #allocation6 [shape = 'u8[16384]{0}', space=vmem, size = 0x4000, scoped, tag = 'input window, operand 5, single buffered']
    %14 = vsyncpa [#allocation3], 0
    %s15 = scalar_lea.sflag [#allocation3], 1
    %16 = vsyncpa %s15, 0
    %17 = vsyncpa [#allocation5], 0
    loop: start=0, step=1, limit=4
    $region2: #{tpu_custom_call.1} parent=1 // loop_pre_header
      _
    $region3: #{tpu_custom_call.1} parent=1 // loop_header
      %s19 = sphi 0, %s23
      %p20 = scmp.ge.s32.totalorder %s19, 4
      %s29 = sphi 0, %s31
      %s32 = sphi 0, %s29
      %s33 = sphi 0, %s32
      %s49 = sphi 0, %s33
      %s53 = sphi 0, %s53
      %s55 = sphi 0, %s53
      %s56 = sphi 0, %s55
      %s70 = sphi 0, %s56
      %s74 = sphi 0, %s74
      %s76 = sphi 0, %s74
      %s77 = sphi 0, %s76
      %s91 = sphi 0, %s77
      %s95 = sphi 0, %s95
      %s97 = sphi 0, %s95
      %s98 = sphi 0, %s97
      %s112 = sphi 0, %s98
      %s116 = sphi 0, %s116
      %s118 = sphi 0, %s116
      %s119 = sphi 0, %s118
      %s133 = sphi 0, %s119
      %s137 = sphi 0, %s137
      %s139 = sphi 0, %s137
      %s140 = sphi 0, %s139
      %s154 = sphi 0, %s140
      %s158 = sphi 0, %s158
      %s160 = sphi 0, %s158
      %s161 = sphi 0, %s160
      %s175 = sphi 0, %s161
      %s179 = sphi 0, %s179
      %s181 = sphi 0, %s179
      %s182 = sphi 0, %s181
      %s196 = sphi 0, %s182
      %s200 = sphi 0, %s200
      %s202 = sphi 0, %s200
      %s203 = sphi 0, %s202
      %s217 = sphi 0, %s203
      %s223 = sphi 0, %s225
      %s226 = sphi 0, %s223
      %s227 = sphi 0, %s226
      %s243 = sphi 0, %s227
    $region4: #{tpu_custom_call.1} parent=1 // loop_header_branch
      %22 = sbr.rel (%p20) target = $region8
    $region5: #{tpu_custom_call.1} parent=1 // loop_body
      %s24 = ssub.s32 %s19, 1
      %s25 = ssub.s32 %s19, 2
      %s26 = sadd.s32 %s19, 1
      %s27 = ssub.s32 %s19, %s26
      %p28 = scmp.eq.s32.totalorder %s27, 0
      %s30 = sadd.s32 %s29, 1
      %s31 = scalar_select %p28, %s29, %s30
      %p34 = pneg %p28
      %p35 = scmp.eq.s32.totalorder %s19, 1
      %p36 = por %p34, %p35
      %p37 = scmp.ne.s32.totalorder %s29, %s32
      %p38 = scmp.eq.s32.totalorder %s19, 0
      %p39 = por %p37, %p38
      %p40 = scmp.ne.s32.totalorder %s29, %s32
      %p41 = scmp.eq.s32.totalorder %s24, 1
      %p42 = por %p40, %p41
      %p43 = scmp.ne.s32.totalorder %s32, %s33
      %p44 = scmp.eq.s32.totalorder %s24, 0
      %p45 = por %p43, %p44
      %p46 = scmp.ne.s32.totalorder %s32, %s33
      %p47 = scmp.eq.s32.totalorder %s25, 1
      %p48 = por %p46, %p47
      %p50 = scmp.ne.s32.totalorder %s33, %s49
      %p51 = scmp.eq.s32.totalorder %s25, 0
      %p52 = por %p50, %p51
      %s54 = sadd.s32 %s53, 1
      %p57 = scmp.eq.s32.totalorder %s19, 1
      %p58 = scmp.ne.s32.totalorder %s53, %s55
      %p59 = scmp.eq.s32.totalorder %s19, 0
      %p60 = por %p58, %p59
      %p61 = scmp.ne.s32.totalorder %s53, %s55
      %p62 = scmp.eq.s32.totalorder %s24, 1
      %p63 = por %p61, %p62
      %p64 = scmp.ne.s32.totalorder %s55, %s56
      %p65 = scmp.eq.s32.totalorder %s24, 0
      %p66 = por %p64, %p65
      %p67 = scmp.ne.s32.totalorder %s55, %s56
      %p68 = scmp.eq.s32.totalorder %s25, 1
      %p69 = por %p67, %p68
      %p71 = scmp.ne.s32.totalorder %s56, %s70
      %p72 = scmp.eq.s32.totalorder %s25, 0
      %p73 = por %p71, %p72
      %s75 = sadd.s32 %s74, 1
      %p78 = scmp.eq.s32.totalorder %s19, 1
      %p79 = scmp.ne.s32.totalorder %s74, %s76
      %p80 = scmp.eq.s32.totalorder %s19, 0
      %p81 = por %p79, %p80
      %p82 = scmp.ne.s32.totalorder %s74, %s76
      %p83 = scmp.eq.s32.totalorder %s24, 1
      %p84 = por %p82, %p83
      %p85 = scmp.ne.s32.totalorder %s76, %s77
      %p86 = scmp.eq.s32.totalorder %s24, 0
      %p87 = por %p85, %p86
      %p88 = scmp.ne.s32.totalorder %s76, %s77
      %p89 = scmp.eq.s32.totalorder %s25, 1
      %p90 = por %p88, %p89
      %p92 = scmp.ne.s32.totalorder %s77, %s91
      %p93 = scmp.eq.s32.totalorder %s25, 0
      %p94 = por %p92, %p93
      %s96 = sadd.s32 %s95, 1
      %p99 = scmp.eq.s32.totalorder %s19, 1
      %p100 = scmp.ne.s32.totalorder %s95, %s97
      %p101 = scmp.eq.s32.totalorder %s19, 0
      %p102 = por %p100, %p101
      %p103 = scmp.ne.s32.totalorder %s95, %s97
      %p104 = scmp.eq.s32.totalorder %s24, 1
      %p105 = por %p103, %p104
      %p106 = scmp.ne.s32.totalorder %s97, %s98
      %p107 = scmp.eq.s32.totalorder %s24, 0
      %p108 = por %p106, %p107
      %p109 = scmp.ne.s32.totalorder %s97, %s98
      %p110 = scmp.eq.s32.totalorder %s25, 1
      %p111 = por %p109, %p110
      %p113 = scmp.ne.s32.totalorder %s98, %s112
      %p114 = scmp.eq.s32.totalorder %s25, 0
      %p115 = por %p113, %p114
      %s117 = sadd.s32 %s116, 1
      %p120 = scmp.eq.s32.totalorder %s19, 1
      %p121 = scmp.ne.s32.totalorder %s116, %s118
      %p122 = scmp.eq.s32.totalorder %s19, 0
      %p123 = por %p121, %p122
      %p124 = scmp.ne.s32.totalorder %s116, %s118
      %p125 = scmp.eq.s32.totalorder %s24, 1
      %p126 = por %p124, %p125
      %p127 = scmp.ne.s32.totalorder %s118, %s119
      %p128 = scmp.eq.s32.totalorder %s24, 0
      %p129 = por %p127, %p128
      %p130 = scmp.ne.s32.totalorder %s118, %s119
      %p131 = scmp.eq.s32.totalorder %s25, 1
      %p132 = por %p130, %p131
      %p134 = scmp.ne.s32.totalorder %s119, %s133
      %p135 = scmp.eq.s32.totalorder %s25, 0
      %p136 = por %p134, %p135
      %s138 = sadd.s32 %s137, 1
      %p141 = scmp.eq.s32.totalorder %s19, 1
      %p142 = scmp.ne.s32.totalorder %s137, %s139
      %p143 = scmp.eq.s32.totalorder %s19, 0
      %p144 = por %p142, %p143
      %p145 = scmp.ne.s32.totalorder %s137, %s139
      %p146 = scmp.eq.s32.totalorder %s24, 1
      %p147 = por %p145, %p146
      %p148 = scmp.ne.s32.totalorder %s139, %s140
      %p149 = scmp.eq.s32.totalorder %s24, 0
      %p150 = por %p148, %p149
      %p151 = scmp.ne.s32.totalorder %s139, %s140
      %p152 = scmp.eq.s32.totalorder %s25, 1
      %p153 = por %p151, %p152
      %p155 = scmp.ne.s32.totalorder %s140, %s154
      %p156 = scmp.eq.s32.totalorder %s25, 0
      %p157 = por %p155, %p156
      %s159 = sadd.s32 %s158, 1
      %p162 = scmp.eq.s32.totalorder %s19, 1
      %p163 = scmp.ne.s32.totalorder %s158, %s160
      %p164 = scmp.eq.s32.totalorder %s19, 0
      %p165 = por %p163, %p164
      %p166 = scmp.ne.s32.totalorder %s158, %s160
      %p167 = scmp.eq.s32.totalorder %s24, 1
      %p168 = por %p166, %p167
      %p169 = scmp.ne.s32.totalorder %s160, %s161
      %p170 = scmp.eq.s32.totalorder %s24, 0
      %p171 = por %p169, %p170
      %p172 = scmp.ne.s32.totalorder %s160, %s161
      %p173 = scmp.eq.s32.totalorder %s25, 1
      %p174 = por %p172, %p173
      %p176 = scmp.ne.s32.totalorder %s161, %s175
      %p177 = scmp.eq.s32.totalorder %s25, 0
      %p178 = por %p176, %p177
      %s180 = sadd.s32 %s179, 1
      %p183 = scmp.eq.s32.totalorder %s19, 1
      %p184 = scmp.ne.s32.totalorder %s179, %s181
      %p185 = scmp.eq.s32.totalorder %s19, 0
      %p186 = por %p184, %p185
      %p187 = scmp.ne.s32.totalorder %s179, %s181
      %p188 = scmp.eq.s32.totalorder %s24, 1
      %p189 = por %p187, %p188
      %p190 = scmp.ne.s32.totalorder %s181, %s182
      %p191 = scmp.eq.s32.totalorder %s24, 0
      %p192 = por %p190, %p191
      %p193 = scmp.ne.s32.totalorder %s181, %s182
      %p194 = scmp.eq.s32.totalorder %s25, 1
      %p195 = por %p193, %p194
      %p197 = scmp.ne.s32.totalorder %s182, %s196
      %p198 = scmp.eq.s32.totalorder %s25, 0
      %p199 = por %p197, %p198
      %s201 = sadd.s32 %s200, 1
      %p204 = scmp.eq.s32.totalorder %s19, 1
      %p205 = scmp.ne.s32.totalorder %s200, %s202
      %p206 = scmp.eq.s32.totalorder %s19, 0
      %p207 = por %p205, %p206
      %p208 = scmp.ne.s32.totalorder %s200, %s202
      %p209 = scmp.eq.s32.totalorder %s24, 1
      %p210 = por %p208, %p209
      %p211 = scmp.ne.s32.totalorder %s202, %s203
      %p212 = scmp.eq.s32.totalorder %s24, 0
      %p213 = por %p211, %p212
      %p214 = scmp.ne.s32.totalorder %s202, %s203
      %p215 = scmp.eq.s32.totalorder %s25, 1
      %p216 = por %p214, %p215
      %p218 = scmp.ne.s32.totalorder %s203, %s217
      %p219 = scmp.eq.s32.totalorder %s25, 0
      %p220 = por %p218, %p219
      %s221 = ssub.s32 %s19, %s26
      %p222 = scmp.eq.s32.totalorder %s221, 0
      %s224 = sadd.s32 %s223, 1
      %s225 = scalar_select %p222, %s223, %s224
      %p228 = pneg %p222
      %p229 = scmp.eq.s32.totalorder %s19, 1
      %p230 = por %p228, %p229
      %p231 = scmp.ne.s32.totalorder %s223, %s226
      %p232 = scmp.eq.s32.totalorder %s19, 0
      %p233 = por %p231, %p232
      %p234 = scmp.ne.s32.totalorder %s223, %s226
      %p235 = scmp.eq.s32.totalorder %s24, 1
      %p236 = por %p234, %p235
      %p237 = scmp.ne.s32.totalorder %s226, %s227
      %p238 = scmp.eq.s32.totalorder %s24, 0
      %p239 = por %p237, %p238
      %p240 = scmp.ne.s32.totalorder %s226, %s227
      %p241 = scmp.eq.s32.totalorder %s25, 1
      %p242 = por %p240, %p241
      %p244 = scmp.ne.s32.totalorder %s227, %s243
      %p245 = scmp.eq.s32.totalorder %s25, 0
      %p246 = por %p244, %p245
      %p247 = scmp.le.s32.totalorder 1, %s19
      %p248 = scmp.lt.s32.totalorder %s19, 3
      %p249 = pnand %p247, %p248
      %p250 = pneg %p249
      // Predicated region
      $region9: #{tpu_custom_call.1} parent=5 // pred_check
        _
      $region10: #{tpu_custom_call.1} parent=5 // pred_check_branch
        %252 = sbr.rel (%p249) target = $region12
      $region11: #{tpu_custom_call.1} parent=5 // pred_region
        %s253 = ssub.s32 %s19, 1
        // Predicated region
        $region13: #{tpu_custom_call.1} parent=11 // pred_check
          %p254 = pneg %p66
        $region14: #{tpu_custom_call.1} parent=11 // pred_check_branch
          %256 = sbr.rel (%p254) target = $region16
        $region15: #{tpu_custom_call.1} parent=11 // pred_region
          %258 = vsyncadd [#allocation5], 0
          %s259 = sshll.u32 %s1, 4
          %s260 = int_to_ptr.hbm [resolvable:$true] %s259
          %s261 = sshll.u32 [#allocation4], 4
          %s262 = int_to_ptr.vmem [resolvable:$true] %s261
          %267 = dma.hbm_to_vmem [thread:$0]  %s260, 384, %s262, [#allocation5], 128, 128, 8
        $region16: #{tpu_custom_call.1} parent=11 // pred_fallthru
          _
        // Predicated region
        $region17: #{tpu_custom_call.1} parent=11 // pred_check
          %p268 = pneg %p87
        $region18: #{tpu_custom_call.1} parent=11 // pred_check_branch
          %270 = sbr.rel (%p268) target = $region20
        $region19: #{tpu_custom_call.1} parent=11 // pred_region
          _
        $region20: #{tpu_custom_call.1} parent=11 // pred_fallthru
          _
        // Predicated region
        $region21: #{tpu_custom_call.1} parent=11 // pred_check
          %p271 = pneg %p108
        $region22: #{tpu_custom_call.1} parent=11 // pred_check_branch
          %273 = sbr.rel (%p271) target = $region24
        $region23: #{tpu_custom_call.1} parent=11 // pred_region
          _
        $region24: #{tpu_custom_call.1} parent=11 // pred_fallthru
          _
        // Predicated region
        $region25: #{tpu_custom_call.1} parent=11 // pred_check
          %p274 = pneg %p129
        $region26: #{tpu_custom_call.1} parent=11 // pred_check_branch
          %276 = sbr.rel (%p274) target = $region28
        $region27: #{tpu_custom_call.1} parent=11 // pred_region
          _
        $region28: #{tpu_custom_call.1} parent=11 // pred_fallthru
          _
        // Predicated region
        $region29: #{tpu_custom_call.1} parent=11 // pred_check
          %p277 = pneg %p150
        $region30: #{tpu_custom_call.1} parent=11 // pred_check_branch
          %279 = sbr.rel (%p277) target = $region32
        $region31: #{tpu_custom_call.1} parent=11 // pred_region
          %281 = vsyncadd [#allocation5], 0
          %s282 = sshll.u32 %s5, 4
          %s283 = int_to_ptr.hbm [resolvable:$true] %s282
          %s284 = sshll.u32 [#allocation6], 4
          %s285 = int_to_ptr.vmem [resolvable:$true] %s284
          %290 = dma.hbm_to_vmem [thread:$0]  %s283, 512, %s285, [#allocation5], 128, 128, 8
        $region32: #{tpu_custom_call.1} parent=11 // pred_fallthru
          _
        // Predicated region
        $region33: #{tpu_custom_call.1} parent=11 // pred_check
          %p291 = pneg %p171
        $region34: #{tpu_custom_call.1} parent=11 // pred_check_branch
          %293 = sbr.rel (%p291) target = $region36
        $region35: #{tpu_custom_call.1} parent=11 // pred_region
          _
        $region36: #{tpu_custom_call.1} parent=11 // pred_fallthru
          _
        // Predicated region
        $region37: #{tpu_custom_call.1} parent=11 // pred_check
          %p294 = pneg %p192
        $region38: #{tpu_custom_call.1} parent=11 // pred_check_branch
          %296 = sbr.rel (%p294) target = $region40
        $region39: #{tpu_custom_call.1} parent=11 // pred_region
          _
        $region40: #{tpu_custom_call.1} parent=11 // pred_fallthru
          _
        // Predicated region
        $region41: #{tpu_custom_call.1} parent=11 // pred_check
          %p297 = pneg %p213
        $region42: #{tpu_custom_call.1} parent=11 // pred_check_branch
          %299 = sbr.rel (%p297) target = $region44
        $region43: #{tpu_custom_call.1} parent=11 // pred_region
          _
        $region44: #{tpu_custom_call.1} parent=11 // pred_fallthru
          _
      $region12: #{tpu_custom_call.1} parent=5 // pred_fallthru
        _
      %p300 = scmp.lt.s32.totalorder %s19, 2
      // Predicated region
      $region45: #{tpu_custom_call.1} parent=5 // pred_check
        %p301 = pneg %p300
      $region46: #{tpu_custom_call.1} parent=5 // pred_check_branch
        %303 = sbr.rel (%p301) target = $region48
      $region47: #{tpu_custom_call.1} parent=5 // pred_region
        // Predicated region
        $region49: #{tpu_custom_call.1} parent=47 // pred_check
          %p304 = pneg %p39
        $region50: #{tpu_custom_call.1} parent=47 // pred_check_branch
          %306 = sbr.rel (%p304) target = $region52
        $region51: #{tpu_custom_call.1} parent=47 // pred_region
          %s307 = sand.u32 %s29, 1
          %s308 = scalar_lea.sflag [#allocation3], %s307
          %s309 = sand.u32 %s29, 1
          %s310 = smul.addr %s309, 8
          %s311 = scalar_lea.vmem [#allocation2], %s310
          %313 = vsyncadd %s308, 0
          %s314 = smul.addr %s19, 8
          %s315 = scalar_lea.hbm %s0, %s314
          %s317 = sshll.u32 %s315, 4
          %s318 = int_to_ptr.hbm [resolvable:$true] %s317
          %s319 = sshll.u32 %s311, 4
          %s320 = int_to_ptr.vmem [resolvable:$true] %s319
          %322 = dma.hbm_to_vmem [thread:$0]  %s318, 128, %s320, %s308
        $region52: #{tpu_custom_call.1} parent=47 // pred_fallthru
          _
      $region48: #{tpu_custom_call.1} parent=5 // pred_fallthru
        _
      %p323 = scmp.le.s32.totalorder 1, %s19
      %p324 = scmp.lt.s32.totalorder %s19, 3
      %p325 = pnand %p323, %p324
      %p326 = pneg %p325
      // Predicated region
      $region53: #{tpu_custom_call.1} parent=5 // pred_check
        _
      $region54: #{tpu_custom_call.1} parent=5 // pred_check_branch
        %328 = sbr.rel (%p325) target = $region56
      $region55: #{tpu_custom_call.1} parent=5 // pred_region
        %s329 = ssub.s32 %s19, 1
        %s330 = sand.u32 %s32, 1
        %s331 = scalar_lea.sflag [#allocation3], %s330
        %s332 = sand.u32 %s32, 1
        %s333 = smul.addr %s332, 8
        %s334 = scalar_lea.vmem [#allocation2], %s333
        // Predicated region
        $region57: #{tpu_custom_call.1} parent=55 // pred_check
          %p335 = pneg %p45
        $region58: #{tpu_custom_call.1} parent=55 // pred_check_branch
          %337 = sbr.rel (%p335) target = $region60
        $region59: #{tpu_custom_call.1} parent=55 // pred_region
          %339 = dma.done %s331, 128
        $region60: #{tpu_custom_call.1} parent=55 // pred_fallthru
          _
        // Predicated region
        $region61: #{tpu_custom_call.1} parent=55 // pred_check
          %p340 = pneg %p66
        $region62: #{tpu_custom_call.1} parent=55 // pred_check_branch
          %342 = sbr.rel (%p340) target = $region64
        $region63: #{tpu_custom_call.1} parent=55 // pred_region
          %344 = dma.done [#allocation5], 384
        $region64: #{tpu_custom_call.1} parent=55 // pred_fallthru
          _
        // Predicated region
        $region65: #{tpu_custom_call.1} parent=55 // pred_check
          %p345 = pneg %p150
        $region66: #{tpu_custom_call.1} parent=55 // pred_check_branch
          %347 = sbr.rel (%p345) target = $region68
        $region67: #{tpu_custom_call.1} parent=55 // pred_region
          %349 = dma.done [#allocation5], 512
        $region68: #{tpu_custom_call.1} parent=55 // pred_fallthru
          _
        %s350 = sand.u32 %s32, 1
        %s351 = scalar_lea.sflag [#allocation3], %s350
        %s352 = sand.u32 %s32, 1
        %s353 = smul.addr %s352, 8
        %s354 = scalar_lea.vmem [#allocation2], %s353
        %p355 = pneg %p45
        %p356 = pneg %p42
        %p357 = pneg %p66
        %p358 = pneg %p63
        %p359 = pneg %p87
        %p360 = pneg %p84
        %p361 = pneg %p108
        %p362 = pneg %p105
        %p363 = pneg %p129
        %p364 = pneg %p126
        %p365 = pneg %p150
        %p366 = pneg %p147
        %p367 = pneg %p171
        %p368 = pneg %p168
        %p369 = pneg %p192
        %p370 = pneg %p189
        %p371 = pneg %p213
        %p372 = pneg %p210
        %p373 = pneg %p239
        %p374 = pneg %p236
        %p375 = scmp.lt.s32.totalorder %s24, 1
        %s376 = scalar_select %p375, %s24, 1
        %s377 = smul.addr %s376, 8
        %s378 = scalar_lea.vmem %s9, %s377
        %p379 = scmp.lt.s32.totalorder %s24, 1
        %s380 = scalar_select %p379, %s24, 1
        %s381 = smul.addr %s380, 8
        %s382 = scalar_lea.vmem %s9, %s381
        %v383 = vld [vmem:[%s334] sm:$0xff]
        %v384 = vld [vmem:[#allocation4] sm:$0xff]
        %v385 = vld [vmem:[#allocation4 + $0x8] sm:$0xff]
        %v386 = vld [vmem:[#allocation4 + $0x10] sm:$0xff]
        %v387 = vld [vmem:[%s2] sm:$0x1]
        %v389 = vperm.slane %v387, 0
        %vm391 = vcmask 195584
        %v393 = vsel %vm391, %v383, 0
        %395 = vmatpush.msra.mxu0 0.0
        %396 = vmatpush.msra.mxu0 0.0
        %397 = vmatpush.msra.mxu0 0.0
        %398 = vmatpush.msra.mxu0 0.0
        %399 = vmatpush.msra.mxu0 0.0
        %400 = vmatpush.msra.mxu0 0.0
        %401 = vmatpush.msra.mxu0 0.0
        %402 = vmatpush.msra.mxu0 0.0
        %403 = vmatpush.msra.mxu0 0.0
        %404 = vmatpush.msra.mxu0 0.0
        %405 = vmatpush.msra.mxu0 0.0
        %406 = vmatpush.msra.mxu0 0.0
        %407 = vmatpush.msra.mxu0 0.0
        %408 = vmatpush.msra.mxu0 %v386
        %409 = vmatpush.msra.mxu0 %v385
        %410 = vmatpush.msra.mxu0 %v384
        %411 = vmatmul.f32.gmra.mxu0 %v393
        %v412 = vpop.f32.mrf.mxu0
        %v413 = vadd.f32 %v389, %v412
        %414 = vdwg.mxu0
        %vm415 = vcmp.gt.f32.partialorder %v413, 0.0
        %v416 = vmin.f32 %v413, 0.0
        %v417 = vmul.f32 %v416, 1.442695
        %v418 = vpow.pop %v417
        %v419 = vsub.f32 %v418, 1.0
        %v420 = vsel %vm415, %v413, %v419
        %v421 = vld [vmem:[%s3] sm:$0xff]
        %v422 = vld [vmem:[%s3 + $0x8] sm:$0xff]
        %v423 = vld [vmem:[%s3 + $0x10] sm:$0xff]
        %v424 = vld [vmem:[%s3 + $0x18] sm:$0xff]
        %v425 = vld [vmem:[%s4] sm:$0x1]
        %v427 = vperm.slane %v425, 0
        %vm429 = vcmask 261120
        %v431 = vsel %vm429, %v420, 0
        %433 = vmatpush.msra.mxu0 0.0
        %434 = vmatpush.msra.mxu0 0.0
        %435 = vmatpush.msra.mxu0 0.0
        %436 = vmatpush.msra.mxu0 0.0
        %437 = vmatpush.msra.mxu0 0.0
        %438 = vmatpush.msra.mxu0 0.0
        %439 = vmatpush.msra.mxu0 0.0
        %440 = vmatpush.msra.mxu0 0.0
        %441 = vmatpush.msra.mxu0 0.0
        %442 = vmatpush.msra.mxu0 0.0
        %443 = vmatpush.msra.mxu0 0.0
        %444 = vmatpush.msra.mxu0 0.0
        %445 = vmatpush.msra.mxu0 %v424
        %446 = vmatpush.msra.mxu0 %v423
        %447 = vmatpush.msra.mxu0 %v422
        %448 = vmatpush.msra.mxu0 %v421
        %449 = vmatmul.f32.gmra.mxu0 %v431
        %v450 = vpop.f32.mrf.mxu0
        %v451 = vadd.f32 %v427, %v450
        %452 = vdwg.mxu0
        %vm453 = vcmp.gt.f32.partialorder %v451, 0.0
        %v454 = vmin.f32 %v451, 0.0
        %v455 = vmul.f32 %v454, 1.442695
        %v456 = vpow.pop %v455
        %v457 = vsub.f32 %v456, 1.0
        %v458 = vsel %vm453, %v451, %v457
        %v459 = vld [vmem:[#allocation6] sm:$0xff]
        %v460 = vld [vmem:[#allocation6 + $0x8] sm:$0xff]
        %v461 = vld [vmem:[#allocation6 + $0x10] sm:$0xff]
        %v462 = vld [vmem:[#allocation6 + $0x18] sm:$0xff]
        %v463 = vld [vmem:[%s6] sm:$0x1]
        %v465 = vperm.slane %v463, 0
        %v468 = vsel %vm429, %v458, 0
        %470 = vmatpush.msra.mxu0 0.0
        %471 = vmatpush.msra.mxu0 0.0
        %472 = vmatpush.msra.mxu0 0.0
        %473 = vmatpush.msra.mxu0 0.0
        %474 = vmatpush.msra.mxu0 0.0
        %475 = vmatpush.msra.mxu0 0.0
        %476 = vmatpush.msra.mxu0 0.0
        %477 = vmatpush.msra.mxu0 0.0
        %478 = vmatpush.msra.mxu0 0.0
        %479 = vmatpush.msra.mxu0 0.0
        %480 = vmatpush.msra.mxu0 0.0
        %481 = vmatpush.msra.mxu0 0.0
        %482 = vmatpush.msra.mxu0 %v462
        %483 = vmatpush.msra.mxu0 %v461
        %484 = vmatpush.msra.mxu0 %v460
        %485 = vmatpush.msra.mxu0 %v459
        %486 = vmatmul.f32.gmra.mxu0 %v468
        %v487 = vpop.f32.mrf.mxu0
        %v488 = vadd.f32 %v465, %v487
        %489 = vdwg.mxu0
        %vm490 = vcmp.gt.f32.partialorder %v488, 0.0
        %v491 = vmin.f32 %v488, 0.0
        %v492 = vmul.f32 %v491, 1.442695
        %v493 = vpow.pop %v492
        %v494 = vsub.f32 %v493, 1.0
        %v495 = vsel %vm490, %v488, %v494
        %v496 = vld [vmem:[%s7] sm:$0xff]
        %v497 = vld [vmem:[%s7 + $0x8] sm:$0xff]
        %v498 = vld [vmem:[%s7 + $0x10] sm:$0xff]
        %v499 = vld [vmem:[%s7 + $0x18] sm:$0xff]
        %v500 = vld [vmem:[%s8] sm:$0x1]
        %v502 = vperm.slane %v500, 0
        %v505 = vsel %vm429, %v495, 0
        %507 = vmatpush.msra.mxu0 0.0
        %508 = vmatpush.msra.mxu0 0.0
        %509 = vmatpush.msra.mxu0 0.0
        %510 = vmatpush.msra.mxu0 0.0
        %511 = vmatpush.msra.mxu0 0.0
        %512 = vmatpush.msra.mxu0 0.0
        %513 = vmatpush.msra.mxu0 0.0
        %514 = vmatpush.msra.mxu0 0.0
        %515 = vmatpush.msra.mxu0 0.0
        %516 = vmatpush.msra.mxu0 0.0
        %517 = vmatpush.msra.mxu0 0.0
        %518 = vmatpush.msra.mxu0 0.0
        %519 = vmatpush.msra.mxu0 %v499
        %520 = vmatpush.msra.mxu0 %v498
        %521 = vmatpush.msra.mxu0 %v497
        %522 = vmatpush.msra.mxu0 %v496
        %523 = vmatmul.f32.gmra.mxu0 %v505
        %v524 = vpop.f32.mrf.mxu0
        %v525 = vadd.f32 %v502, %v524
        %526 = vdwg.mxu0
        %v527 = vtanh.pop %v525
        %v528 = vmul.f32 %v527, 2.0
        %v529 = vsub.f32 0.0, %v525
        %v530 = vmul.f32 %v529, 1.442695
        %v531 = vpow.pop %v530
        %v532 = vadd.f32 %v531, 1.0
        %v533 = vrcp.pop %v532
        %v534 = vmul.f32 %v533, 4.0
        %v535 = vadd.f32 %v534, -5.0
        %v536 = vmul.f32 %v535, 1.442695
        %v537 = vpow.pop %v536
        %v538 = vlaneseq
        %v539 = vand.u32 %v538, 127
        %vm540 = vcmp.lt.s32.totalorder %v539, 4
        %v541 = vsel %vm540, %v528, %v537
        %vm542 = vcmask 64512
        %543 = vst.msk [vmem:[%s382] sm:$0xff] %vm542, %v541
        %p544 = scmp.lt.s32.totalorder %s24, 1
        %s545 = scalar_select %p544, %s24, 1
        %s546 = smul.addr %s545, 8
        %s547 = scalar_lea.vmem %s9, %s546
        // Predicated region
        $region69: #{tpu_custom_call.1} parent=55 // pred_check
          %p548 = pneg %p236
        $region70: #{tpu_custom_call.1} parent=55 // pred_check_branch
          %550 = sbr.rel (%p548) target = $region72
        $region71: #{tpu_custom_call.1} parent=55 // pred_region
          _
        $region72: #{tpu_custom_call.1} parent=55 // pred_fallthru
          _
      $region56: #{tpu_custom_call.1} parent=5 // pred_fallthru
        _
      %p551 = scmp.le.s32.totalorder 2, %s19
      // Predicated region
      $region73: #{tpu_custom_call.1} parent=5 // pred_check
        %p552 = pneg %p551
      $region74: #{tpu_custom_call.1} parent=5 // pred_check_branch
        %554 = sbr.rel (%p552) target = $region76
      $region75: #{tpu_custom_call.1} parent=5 // pred_region
        %s555 = ssub.s32 %s19, 2
        // Predicated region
        $region77: #{tpu_custom_call.1} parent=75 // pred_check
          %p556 = pneg %p242
        $region78: #{tpu_custom_call.1} parent=75 // pred_check_branch
          %558 = sbr.rel (%p556) target = $region80
        $region79: #{tpu_custom_call.1} parent=75 // pred_region
          %p559 = scmp.lt.s32.totalorder %s25, 1
          %s560 = scalar_select %p559, %s25, 1
          %s561 = smul.addr %s560, 8
          %s562 = scalar_lea.vmem %s9, %s561
        $region80: #{tpu_custom_call.1} parent=75 // pred_fallthru
          _
      $region76: #{tpu_custom_call.1} parent=5 // pred_fallthru
        _
    $region6: #{tpu_custom_call.1} parent=1 // loop_footer
      %s23 = sadd.s32 1, %s19
    $region7: #{tpu_custom_call.1} parent=1 // loop_footer_branch
      %18 = sbr.rel target = $region3
    $region8: #{tpu_custom_call.1} parent=1 // loop_exit
      _
    %563 = vsyncpa [#allocation3], 1
    %s564 = scalar_lea.sflag [#allocation3], 1
    %565 = vsyncpa %s564, 1
    %566 = vsyncpa [#allocation5], 1

</llo_original>
